<compile_context>
chip_gen: v7x
topology: tpu7x:2x2x1
jax: 0.10.0
libtpu: 0.0.40
codegen_flags: <defaults>
</compile_context>

<pallas_src>
import jax
import jax.numpy as jnp
from jax.experimental import pallas as pl
from jax.experimental.pallas import tpu as pltpu

_LANE = 128


def _round_up(x, m):
    return ((x + m - 1) // m) * m


def _pick_tiles(n_rows, n_contract):
    """Pick (tm, m_pad, tk, k_pad) for the row / reduction grid axes."""
    # Row tile: multiple of 16 (bf16 sublane-safe), capped for VMEM.
    tm = min(512, _round_up(n_rows, 16))
    # Prefer >= 2 grid steps on the parallel axis (v7x megacore: 2 TCs).
    if _round_up(n_rows, tm) // tm < 2 and n_rows >= 32:
        tm = _round_up(max(16, n_rows // 2), 16)
    m_pad = _round_up(n_rows, tm)
    # K tile: lane dim of A -> multiple of 128, bounded so VMEM stays small.
    tk = min(256, _round_up(n_contract, _LANE))
    k_pad = _round_up(n_contract, tk)
    return tm, m_pad, tk, k_pad


def _pad2d(a, rows, cols, dtype):
    r, c = a.shape
    return jnp.zeros((rows, cols), dtype).at[:r, :c].set(a.astype(dtype))


# ---------------------------------------------------------------------------
# Kernels
# ---------------------------------------------------------------------------
def _gcn_fused_kernel(a_ref, x_ref, w_ref, o_ref, acc_ref):
    """out = (A @ x) @ W, K-tiled over A's columns; acc is f32 VMEM scratch."""
    k = pl.program_id(1)

    @pl.when(k == 0)
    def _():
        acc_ref[...] = jnp.zeros_like(acc_ref)

    acc_ref[...] += jnp.dot(a_ref[...], x_ref[...],
                            preferred_element_type=jnp.float32)

    @pl.when(k == pl.num_programs(1) - 1)
    def _():
        o_ref[...] = jnp.dot(acc_ref[...].astype(jnp.bfloat16), w_ref[...],
                             preferred_element_type=jnp.float32
                             ).astype(o_ref.dtype)


def _spmm_kernel(a_ref, h_ref, o_ref, acc_ref):
    """out = A @ h, K-tiled over A's columns; acc is f32 VMEM scratch."""
    k = pl.program_id(1)

    @pl.when(k == 0)
    def _():
        acc_ref[...] = jnp.zeros_like(acc_ref)

    acc_ref[...] += jnp.dot(a_ref[...], h_ref[...],
                            preferred_element_type=jnp.float32)

    @pl.when(k == pl.num_programs(1) - 1)
    def _():
        o_ref[...] = acc_ref[...].astype(o_ref.dtype)


# ---------------------------------------------------------------------------
# Wrappers
# ---------------------------------------------------------------------------
def gcn_fused_pallas(A, x, W):
    """(A @ x) @ W in one pallas_call. A:(N,N), x:(N,C_in), W:(C_in,C_out)."""
    N = A.shape[0]
    C_in = x.shape[1]
    C_out = W.shape[1]
    tm, m_pad, tk, k_pad = _pick_tiles(N, N)
    cp = _round_up(C_in, _LANE)
    cop = _round_up(C_out, _LANE)

    A_p = _pad2d(A, m_pad, k_pad, jnp.bfloat16)
    x_p = _pad2d(x, k_pad, cp, jnp.bfloat16)
    w_p = _pad2d(W, cp, cop, jnp.bfloat16)

    out = pl.pallas_call(
        _gcn_fused_kernel,
        out_shape=jax.ShapeDtypeStruct((m_pad, cop), jnp.float32),
        grid_spec=pltpu.PrefetchScalarGridSpec(
            num_scalar_prefetch=0,
            grid=(m_pad // tm, k_pad // tk),
            in_specs=[pl.BlockSpec((tm, tk), lambda i, k: (i, k)),   # A block
                      pl.BlockSpec((tk, cp), lambda i, k: (k, 0)),   # x block
                      pl.BlockSpec((cp, cop), lambda i, k: (0, 0))], # W (resident)
            out_specs=pl.BlockSpec((tm, cop), lambda i, k: (i, 0)),
            scratch_shapes=[pltpu.VMEM((tm, cp), jnp.float32)]),
        compiler_params=pltpu.CompilerParams(
            dimension_semantics=("parallel", "arbitrary")),
    )(A_p, x_p, w_p)
    return out[:N, :C_out]


def spmm_pallas(A, h):
    """A @ h with K-tiling. A:(N,N), h:(N,C)."""
    N = A.shape[0]
    C = h.shape[1]
    tm, m_pad, tk, k_pad = _pick_tiles(N, N)
    cp = _round_up(C, _LANE)

    A_p = _pad2d(A, m_pad, k_pad, jnp.bfloat16)
    h_p = _pad2d(h, k_pad, cp, jnp.bfloat16)

    out = pl.pallas_call(
        _spmm_kernel,
        out_shape=jax.ShapeDtypeStruct((m_pad, cp), jnp.float32),
        grid_spec=pltpu.PrefetchScalarGridSpec(
            num_scalar_prefetch=0,
            grid=(m_pad // tm, k_pad // tk),
            in_specs=[pl.BlockSpec((tm, tk), lambda i, k: (i, k)),
                      pl.BlockSpec((tk, cp), lambda i, k: (k, 0))],
            out_specs=pl.BlockSpec((tm, cp), lambda i, k: (i, 0)),
            scratch_shapes=[pltpu.VMEM((tm, cp), jnp.float32)]),
        compiler_params=pltpu.CompilerParams(
            dimension_semantics=("parallel", "arbitrary")),
    )(A_p, h_p)
    return out[:N, :C]


def build_normalized_adjacency(edge_index, num_nodes):
    """Plain-JAX glue: remove_self_loops + add_self_loops + degree +
    symmetric GCN normalization, scattered into a dense (N, N) f32 matrix."""
    src, dst = edge_index[0], edge_index[1]
    keep = (src != dst).astype(jnp.float32)                    # remove_self_loops
    deg = jnp.zeros((num_nodes,), jnp.float32).at[dst].add(keep) + 1.0
    dinv = jnp.where(deg > 0.0, jax.lax.rsqrt(deg), 0.0)       # deg^-0.5, inf -> 0
    w = dinv[src] * dinv[dst] * keep
    A = jnp.zeros((num_nodes, num_nodes), jnp.float32).at[src, dst].add(w)
    A = A + jnp.diag(dinv * dinv)                              # added self loops
    return A


def gcn_layer_forward(x, edge_index, W=None, simple=False, ff=True):
    N, C_in = x.shape
    A = build_normalized_adjacency(edge_index, N)
    if (not simple) and ff and W is not None:
        C_out = W.shape[1]
        if C_in <= C_out:
            # Algebraic reorder: (A @ x) @ W — cheaper big matmul, fully fused.
            return gcn_fused_pallas(A, x, W)
        # C_in > C_out: keep the original order; the tiny x @ W is left to XLA.
        h = jnp.dot(x, W).astype(jnp.float32)
        return spmm_pallas(A, h)
    return spmm_pallas(A, x)


if __name__ == "__main__":
    key = jax.random.PRNGKey(0)
    N, C_in, C_out, E = 64, 16, 32, 128

    kx, ks, kd, kw = jax.random.split(key, 4)
    x = jax.random.normal(kx, (N, C_in), dtype=jnp.float32)
    src = jax.random.randint(ks, (E,), 0, N)
    dst = jax.random.randint(kd, (E,), 0, N)
    edge_index = jnp.stack([src, dst], axis=0).astype(jnp.int32)   # (2, E)

    # Deterministic Xavier-uniform init with gain=1.414 (reset_parameters).
    gain = 1.414
    bound = gain * (6.0 / (C_in + C_out)) ** 0.5
    W = jax.random.uniform(kw, (C_in, C_out), jnp.float32, -bound, bound)

    out = gcn_layer_forward(x, edge_index, W)
    jax.block_until_ready(out)
    assert out.shape == (N, C_out)
    assert out.dtype == jnp.float32

    # Loose sanity check vs. pure-JAX f32 reference (bf16 operands, f32 accum).
    A = build_normalized_adjacency(edge_index, N)
    ref = A @ (x @ W)
    err = float(jnp.max(jnp.abs(out - ref)))
    scale = float(jnp.max(jnp.abs(ref))) + 1e-6
    assert err <= 5e-2 * scale + 1e-3, (err, scale)

    print("KERNEL_OK")
</pallas_src>

<mosaic_0001>
module attributes {stable_mosaic.version = 11 : i64} {
  func.func @_gcn_fused_kernel(%arg0: i32, %arg1: i32, %arg2: memref<32x128xbf16, #tpu.memory_space<vmem>>, %arg3: memref<128x128xbf16, #tpu.memory_space<vmem>>, %arg4: memref<128x128xbf16, #tpu.memory_space<vmem>>, %arg5: memref<32x128xf32, #tpu.memory_space<vmem>>, %arg6: memref<32x128xf32, #tpu.memory_space<vmem>>) attributes {dimension_semantics = [#tpu.dimension_semantics<parallel>, #tpu.dimension_semantics<arbitrary>], iteration_bounds = array<i64: 2, 1>, scalar_prefetch = 0 : i64, scratch_operands = 1 : i64, tpu.core_type = #tpu.core_type<tc>, window_params = [{transform_indices = @transform_0, window_bounds = array<i64: 32, 128>}, {transform_indices = @transform_1, window_bounds = array<i64: 128, 128>}, {pipeline_mode = #tpu.pipeline_mode<synchronous>, transform_indices = @transform_2, window_bounds = array<i64: 128, 128>}, {transform_indices = @transform_3, window_bounds = array<i64: 32, 128>}]} {
    %c0_i32 = arith.constant 0 : i32
    %0 = arith.cmpi eq, %arg1, %c0_i32 : i32
    %1 = arith.extui %0 : i1 to i32
    %c0_i32_0 = arith.constant 0 : i32
    %2 = arith.cmpi ne, %1, %c0_i32_0 : i32
    scf.if %2 {
      %cst_10 = arith.constant 0.000000e+00 : f32
      %12 = vector.broadcast %cst_10 : f32 to vector<32x128xf32>
      %c0_11 = arith.constant 0 : index
      %c0_12 = arith.constant 0 : index
      %13 = vector.load %arg6[%c0_11, %c0_12] : memref<32x128xf32, #tpu.memory_space<vmem>>, vector<32x128xf32>
      tpu.vector_store %arg6[%c0_11, %c0_12], %12 {strides = array<i32>} : memref<32x128xf32, #tpu.memory_space<vmem>>, vector<32x128xf32>,
    } else {
    }
    %c0 = arith.constant 0 : index
    %c0_1 = arith.constant 0 : index
    %3 = vector.load %arg6[%c0, %c0_1] : memref<32x128xf32, #tpu.memory_space<vmem>>, vector<32x128xf32>
    %c0_2 = arith.constant 0 : index
    %c0_3 = arith.constant 0 : index
    %4 = vector.load %arg2[%c0_2, %c0_3] : memref<32x128xbf16, #tpu.memory_space<vmem>>, vector<32x128xbf16>
    %c0_4 = arith.constant 0 : index
    %c0_5 = arith.constant 0 : index
    %5 = vector.load %arg3[%c0_4, %c0_5] : memref<128x128xbf16, #tpu.memory_space<vmem>>, vector<128x128xbf16>
    %cst = arith.constant dense<0.000000e+00> : vector<32x128xf32>
    %6 = tpu.matmul %4, %5, %cst {dimension_numbers = #tpu.dot_dimension_numbers<[1], [0], [0], [1], [0, 0, 1, 1], [], []>} : vector<32x128xbf16>, vector<128x128xbf16>, vector<32x128xf32> -> vector<32x128xf32>
    %7 = arith.addf %3, %6 : vector<32x128xf32>
    %c0_6 = arith.constant 0 : index
    %c0_7 = arith.constant 0 : index
    %8 = vector.load %arg6[%c0_6, %c0_7] : memref<32x128xf32, #tpu.memory_space<vmem>>, vector<32x128xf32>
    tpu.vector_store %arg6[%c0_6, %c0_7], %7 {strides = array<i32>} : memref<32x128xf32, #tpu.memory_space<vmem>>, vector<32x128xf32>,
    %c0_i32_8 = arith.constant 0 : i32
    %9 = arith.cmpi eq, %arg1, %c0_i32_8 : i32
    %10 = arith.extui %9 : i1 to i32
    %c0_i32_9 = arith.constant 0 : i32
    %11 = arith.cmpi ne, %10, %c0_i32_9 : i32
    scf.if %11 {
      %c0_10 = arith.constant 0 : index
      %c0_11 = arith.constant 0 : index
      %12 = vector.load %arg6[%c0_10, %c0_11] : memref<32x128xf32, #tpu.memory_space<vmem>>, vector<32x128xf32>
      %13 = arith.truncf %12 : vector<32x128xf32> to vector<32x128xbf16>
      %c0_12 = arith.constant 0 : index
      %c0_13 = arith.constant 0 : index
      %14 = vector.load %arg4[%c0_12, %c0_13] : memref<128x128xbf16, #tpu.memory_space<vmem>>, vector<128x128xbf16>
      %cst_14 = arith.constant dense<0.000000e+00> : vector<32x128xf32>
      %15 = tpu.matmul %13, %14, %cst_14 {dimension_numbers = #tpu.dot_dimension_numbers<[1], [0], [0], [1], [0, 0, 1, 1], [], []>} : vector<32x128xbf16>, vector<128x128xbf16>, vector<32x128xf32> -> vector<32x128xf32>
      %c0_15 = arith.constant 0 : index
      %c0_16 = arith.constant 0 : index
      %16 = vector.load %arg5[%c0_15, %c0_16] : memref<32x128xf32, #tpu.memory_space<vmem>>, vector<32x128xf32>
      tpu.vector_store %arg5[%c0_15, %c0_16], %15 {strides = array<i32>} : memref<32x128xf32, #tpu.memory_space<vmem>>, vector<32x128xf32>,
    } else {
    }
    return
  }
  func.func @transform_0(%arg0: i32, %arg1: i32) -> (i32, i32) {
    %c0_i32 = arith.constant 0 : i32
    return %arg0, %arg1 : i32, i32
  }
  func.func @transform_1(%arg0: i32, %arg1: i32) -> (i32, i32) {
    %c0_i32 = arith.constant 0 : i32
    %c0_i32_0 = arith.constant 0 : i32
    return %arg1, %c0_i32 : i32, i32
  }
  func.func @transform_2(%arg0: i32, %arg1: i32) -> (i32, i32) {
    %c0_i32 = arith.constant 0 : i32
    %c0_i32_0 = arith.constant 0 : i32
    %c0_i32_1 = arith.constant 0 : i32
    return %c0_i32, %c0_i32_0 : i32, i32
  }
  func.func @transform_3(%arg0: i32, %arg1: i32) -> (i32, i32) {
    %c0_i32 = arith.constant 0 : i32
    %c0_i32_0 = arith.constant 0 : i32
    return %arg0, %c0_i32 : i32, i32
  }
}

</mosaic_0001>

<llo_original>
// kernel: tpu_custom_call.1
$region0: #{tpu_custom_call.1}
  #allocation0 [shape = 'u32[]', space=smem, size = 0x4, offset = 0x4, fixed_abs, tag = 'smem constant byte address 0x4 - core index']
  #allocation1 [shape = 'u32[144,128]{1,0:T(1,128)}', space=vmem, size = 0x12000, scoped, tag = 'internal scratch']
  #allocation2 [shape = 'f32[32,128]{1,0:T(8,128)}', space=vmem, size = 0x4000, scoped, tag = 'scratch operand']
  %s0 = inlined_call_operand.hbm [shape: bf16[64,128], index: 0, kind: input, shape index: {}]
  %s1 = inlined_call_operand.hbm [shape: bf16[128,128], index: 1, kind: input, shape index: {}]
  %s2 = inlined_call_operand.hbm [shape: bf16[128,128], index: 2, kind: input, shape index: {}]
  %s3 = inlined_call_operand.hbm [shape: f32[64,128], index: 3, kind: output, shape index: {}]
  %s4 = sld [smem:[#allocation0]]
  $region65: #{tpu_custom_call.1} parent=0
    _
  %s6 = ssub.s32 1, %s4
  %s7 = scalar_select 0, %s6, %s4
  $region1: #{tpu_custom_call.1} parent=0
    #allocation3 [shape = 'u8[16384]{0}', space=vmem, size = 0x4000, scoped, tag = 'input window, operand 0']
    #allocation4 [shape = 's32[2]{0}', space=sflag, size = 0x8, scoped, tag = 'scoped memory for tpu_custom_call.1']
    #allocation5 [shape = 's32[2]{0}', space=sflag, size = 0x8, scoped, tag = 'scoped memory for tpu_custom_call.1']
    #allocation6 [shape = 'u8[32768]{0}', space=vmem, size = 0x8000, scoped, tag = 'input window, operand 1, single buffered']
    #allocation7 [shape = 's32[1]{0}', space=sflag, size = 0x4, scoped, tag = 'scoped memory for tpu_custom_call.1']
    #allocation8 [shape = 'u8[32768]{0}', space=vmem, size = 0x8000, scoped, tag = 'input window, operand 2, single buffered']
    #allocation9 [shape = 'u8[32768]{0}', space=vmem, size = 0x8000, scoped, tag = 'output window, operand 0']
    %8 = vsyncpa [#allocation4], 0
    %s9 = scalar_lea.sflag [#allocation4], 1
    %10 = vsyncpa %s9, 0
    %11 = vsyncpa [#allocation7], 0
    %12 = vsyncpa [#allocation5], 0
    %s13 = scalar_lea.sflag [#allocation5], 1
    %14 = vsyncpa %s13, 0
    loop: start=0, step=1, limit=4
    $region2: #{tpu_custom_call.1} parent=1 // loop_pre_header
      _
    $region3: #{tpu_custom_call.1} parent=1 // loop_header
      %s16 = sphi 0, %s20
      %p17 = scmp.ge.s32.totalorder %s16, 4
      %s23 = sphi 0, %s35
      %s24 = sphi 0, %s31
      %s25 = sphi 0, %s23
      %s26 = sphi 0, %s24
      %s27 = sphi 0, %s25
      %s28 = sphi 0, %s26
      %s40 = sphi 0, %s42
      %s43 = sphi 0, %s40
      %s44 = sphi 0, %s43
      %s60 = sphi 0, %s44
      %s66 = sphi 0, %s68
      %s69 = sphi 0, %s66
      %s70 = sphi 0, %s69
      %s86 = sphi 0, %s70
      %s90 = sphi 0, %s90
      %s92 = sphi 0, %s90
      %s93 = sphi 0, %s92
      %s107 = sphi 0, %s93
      %s113 = sphi 0, %s115
      %s116 = sphi 0, %s113
      %s117 = sphi 0, %s116
      %s133 = sphi 0, %s117
    $region4: #{tpu_custom_call.1} parent=1 // loop_header_branch
      %19 = sbr.rel (%p17) target = $region8
    $region5: #{tpu_custom_call.1} parent=1 // loop_body
      %s21 = ssub.s32 %s16, 1
      %s22 = ssub.s32 %s16, 2
      %s29 = sadd.s32 1, %s24
      %p30 = scmp.ge.s32.totalorder %s29, 1
      %s31 = scalar_select %p30, 0, %s29
      %s32 = sadd.s32 1, %s23
      %s33 = scalar_select %p30, %s32, %s23
      %p34 = scmp.ge.s32.totalorder %s33, 2
      %s35 = scalar_select %p34, 0, %s33
      %s36 = ssub.s32 %s23, %s35
      %s37 = ssub.s32 %s24, %s31
      %s38 = sor.u32 %s36, %s37
      %p39 = scmp.eq.s32.totalorder %s38, 0
      %s41 = sadd.s32 %s40, 1
      %s42 = scalar_select %p39, %s40, %s41
      %p45 = pneg %p39
      %p46 = scmp.eq.s32.totalorder %s16, 1
      %p47 = por %p45, %p46
      %p48 = scmp.ne.s32.totalorder %s40, %s43
      %p49 = scmp.eq.s32.totalorder %s16, 0
      %p50 = por %p48, %p49
      %p51 = scmp.ne.s32.totalorder %s40, %s43
      %p52 = scmp.eq.s32.totalorder %s21, 1
      %p53 = por %p51, %p52
      %p54 = scmp.ne.s32.totalorder %s43, %s44
      %p55 = scmp.eq.s32.totalorder %s21, 0
      %p56 = por %p54, %p55
      %p57 = scmp.ne.s32.totalorder %s43, %s44
      %p58 = scmp.eq.s32.totalorder %s22, 1
      %p59 = por %p57, %p58
      %p61 = scmp.ne.s32.totalorder %s44, %s60
      %p62 = scmp.eq.s32.totalorder %s22, 0
      %p63 = por %p61, %p62
      %s64 = ssub.s32 %s24, %s31
      %p65 = scmp.eq.s32.totalorder %s64, 0
      %s67 = sadd.s32 %s66, 1
      %s68 = scalar_select %p65, %s66, %s67
      %p71 = pneg %p65
      %p72 = scmp.eq.s32.totalorder %s16, 1
      %p73 = por %p71, %p72
      %p74 = scmp.ne.s32.totalorder %s66, %s69
      %p75 = scmp.eq.s32.totalorder %s16, 0
      %p76 = por %p74, %p75
      %p77 = scmp.ne.s32.totalorder %s66, %s69
      %p78 = scmp.eq.s32.totalorder %s21, 1
      %p79 = por %p77, %p78
      %p80 = scmp.ne.s32.totalorder %s69, %s70
      %p81 = scmp.eq.s32.totalorder %s21, 0
      %p82 = por %p80, %p81
      %p83 = scmp.ne.s32.totalorder %s69, %s70
      %p84 = scmp.eq.s32.totalorder %s22, 1
      %p85 = por %p83, %p84
      %p87 = scmp.ne.s32.totalorder %s70, %s86
      %p88 = scmp.eq.s32.totalorder %s22, 0
      %p89 = por %p87, %p88
      %s91 = sadd.s32 %s90, 1
      %p94 = scmp.eq.s32.totalorder %s16, 1
      %p95 = scmp.ne.s32.totalorder %s90, %s92
      %p96 = scmp.eq.s32.totalorder %s16, 0
      %p97 = por %p95, %p96
      %p98 = scmp.ne.s32.totalorder %s90, %s92
      %p99 = scmp.eq.s32.totalorder %s21, 1
      %p100 = por %p98, %p99
      %p101 = scmp.ne.s32.totalorder %s92, %s93
      %p102 = scmp.eq.s32.totalorder %s21, 0
      %p103 = por %p101, %p102
      %p104 = scmp.ne.s32.totalorder %s92, %s93
      %p105 = scmp.eq.s32.totalorder %s22, 1
      %p106 = por %p104, %p105
      %p108 = scmp.ne.s32.totalorder %s93, %s107
      %p109 = scmp.eq.s32.totalorder %s22, 0
      %p110 = por %p108, %p109
      %s111 = ssub.s32 %s23, %s35
      %p112 = scmp.eq.s32.totalorder %s111, 0
      %s114 = sadd.s32 %s113, 1
      %s115 = scalar_select %p112, %s113, %s114
      %p118 = pneg %p112
      %p119 = scmp.eq.s32.totalorder %s16, 1
      %p120 = por %p118, %p119
      %p121 = scmp.ne.s32.totalorder %s113, %s116
      %p122 = scmp.eq.s32.totalorder %s16, 0
      %p123 = por %p121, %p122
      %p124 = scmp.ne.s32.totalorder %s113, %s116
      %p125 = scmp.eq.s32.totalorder %s21, 1
      %p126 = por %p124, %p125
      %p127 = scmp.ne.s32.totalorder %s116, %s117
      %p128 = scmp.eq.s32.totalorder %s21, 0
      %p129 = por %p127, %p128
      %p130 = scmp.ne.s32.totalorder %s116, %s117
      %p131 = scmp.eq.s32.totalorder %s22, 1
      %p132 = por %p130, %p131
      %p134 = scmp.ne.s32.totalorder %s117, %s133
      %p135 = scmp.eq.s32.totalorder %s22, 0
      %p136 = por %p134, %p135
      %p137 = scmp.le.s32.totalorder 1, %s16
      %p138 = scmp.lt.s32.totalorder %s16, 3
      %p139 = pnand %p137, %p138
      %p140 = pneg %p139
      // Predicated region
      $region9: #{tpu_custom_call.1} parent=5 // pred_check
        _
      $region10: #{tpu_custom_call.1} parent=5 // pred_check_branch
        %142 = sbr.rel (%p139) target = $region12
      $region11: #{tpu_custom_call.1} parent=5 // pred_region
        %s143 = ssub.s32 %s16, 1
        // Predicated region
        $region13: #{tpu_custom_call.1} parent=11 // pred_check
          %p144 = pneg %p82
        $region14: #{tpu_custom_call.1} parent=11 // pred_check_branch
          %146 = sbr.rel (%p144) target = $region16
        $region15: #{tpu_custom_call.1} parent=11 // pred_region
          %s147 = smul.u32 16, %s26
          %s149 = ssub.s32 1024, 1024
          %150 = vsyncadd [#allocation7], %s149
          %s151 = smul.addr %s147, 64
          %s152 = scalar_lea.hbm %s1, %s151
          %s153 = sshll.u32 [#allocation6], 4
          %s154 = int_to_ptr.vmem [resolvable:$true] %s153
          %159 = dma.hbm_to_vmem [thread:$0]  %s152, 1024, %s154, [#allocation7], 64, 64, 4
        $region16: #{tpu_custom_call.1} parent=11 // pred_fallthru
          _
        // Predicated region
        $region17: #{tpu_custom_call.1} parent=11 // pred_check
          %p160 = pneg %p103
        $region18: #{tpu_custom_call.1} parent=11 // pred_check_branch
          %162 = sbr.rel (%p160) target = $region20
        $region19: #{tpu_custom_call.1} parent=11 // pred_region
          %s164 = ssub.s32 1024, 1024
          %165 = vsyncadd [#allocation7], %s164
          %s166 = sshll.u32 [#allocation8], 4
          %s167 = int_to_ptr.vmem [resolvable:$true] %s166
          %172 = dma.hbm_to_vmem [thread:$0]  %s2, 1024, %s167, [#allocation7], 64, 64, 4
        $region20: #{tpu_custom_call.1} parent=11 // pred_fallthru
          _
      $region12: #{tpu_custom_call.1} parent=5 // pred_fallthru
        _
      %p173 = scmp.lt.s32.totalorder %s16, 2
      // Predicated region
      $region21: #{tpu_custom_call.1} parent=5 // pred_check
        %p174 = pneg %p173
      $region22: #{tpu_custom_call.1} parent=5 // pred_check_branch
        %176 = sbr.rel (%p174) target = $region24
      $region23: #{tpu_custom_call.1} parent=5 // pred_region
        // Predicated region
        $region25: #{tpu_custom_call.1} parent=23 // pred_check
          %p177 = pneg %p50
        $region26: #{tpu_custom_call.1} parent=23 // pred_check_branch
          %179 = sbr.rel (%p177) target = $region28
        $region27: #{tpu_custom_call.1} parent=23 // pred_region
          %s180 = sand.u32 %s40, 1
          %s181 = scalar_lea.sflag [#allocation4], %s180
          %s182 = sand.u32 %s40, 1
          %s183 = smul.addr %s182, 16
          %s184 = scalar_lea.vmem [#allocation3], %s183
          %s185 = smul.u32 4, %s23
          %s187 = ssub.s32 256, 256
          %188 = vsyncadd %s181, %s187
          %s189 = sadd.s32 %s24, %s185
          %s190 = smul.addr %s189, 64
          %s191 = scalar_lea.hbm %s0, %s190
          %s192 = sshll.u32 %s184, 4
          %s193 = int_to_ptr.vmem [resolvable:$true] %s192
          %198 = dma.hbm_to_vmem [thread:$0]  %s191, 256, %s193, %s181, 64, 64, 4
        $region28: #{tpu_custom_call.1} parent=23 // pred_fallthru
          _
      $region24: #{tpu_custom_call.1} parent=5 // pred_fallthru
        _
      %p199 = scmp.le.s32.totalorder 1, %s16
      %p200 = scmp.lt.s32.totalorder %s16, 3
      %p201 = pnand %p199, %p200
      %p202 = pneg %p201
      // Predicated region
      $region29: #{tpu_custom_call.1} parent=5 // pred_check
        _
      $region30: #{tpu_custom_call.1} parent=5 // pred_check_branch
        %204 = sbr.rel (%p201) target = $region32
      $region31: #{tpu_custom_call.1} parent=5 // pred_region
        %s205 = ssub.s32 %s16, 1
        %s206 = sand.u32 %s43, 1
        %s207 = scalar_lea.sflag [#allocation4], %s206
        %s208 = sand.u32 %s43, 1
        %s209 = smul.addr %s208, 16
        %s210 = scalar_lea.vmem [#allocation3], %s209
        // Predicated region
        $region33: #{tpu_custom_call.1} parent=31 // pred_check
          %p211 = pneg %p56
        $region34: #{tpu_custom_call.1} parent=31 // pred_check_branch
          %213 = sbr.rel (%p211) target = $region36
        $region35: #{tpu_custom_call.1} parent=31 // pred_region
          %214 = dma.done %s207, 256
        $region36: #{tpu_custom_call.1} parent=31 // pred_fallthru
          _
        // Predicated region
        $region37: #{tpu_custom_call.1} parent=31 // pred_check
          %p215 = pneg %p82
        $region38: #{tpu_custom_call.1} parent=31 // pred_check_branch
          %217 = sbr.rel (%p215) target = $region40
        $region39: #{tpu_custom_call.1} parent=31 // pred_region
          %218 = dma.done [#allocation7], 1024
        $region40: #{tpu_custom_call.1} parent=31 // pred_fallthru
          _
        // Predicated region
        $region41: #{tpu_custom_call.1} parent=31 // pred_check
          %p219 = pneg %p103
        $region42: #{tpu_custom_call.1} parent=31 // pred_check_branch
          %221 = sbr.rel (%p219) target = $region44
        $region43: #{tpu_custom_call.1} parent=31 // pred_region
          %222 = dma.done [#allocation7], 1024
        $region44: #{tpu_custom_call.1} parent=31 // pred_fallthru
          _
        %s223 = sand.u32 %s43, 1
        %s224 = scalar_lea.sflag [#allocation4], %s223
        %s225 = sand.u32 %s43, 1
        %s226 = smul.addr %s225, 16
        %s227 = scalar_lea.vmem [#allocation3], %s226
        %p228 = pneg %p56
        %p229 = pneg %p53
        %p230 = pneg %p82
        %p231 = pneg %p79
        %p232 = pneg %p103
        %p233 = pneg %p100
        %p234 = pneg %p129
        %p235 = pneg %p126
        %s236 = sand.u32 %s116, 1
        %s237 = scalar_lea.sflag [#allocation5], %s236
        %s238 = sand.u32 %s116, 1
        %s239 = smul.addr %s238, 32
        %s240 = scalar_lea.vmem [#allocation9], %s239
        %s241 = smul.u32 4, %s25
        %s242 = smul.u32 16, %s26
        %s243 = smul.u32 4, %s25
        %p245 = scmp.eq.s32.totalorder %s26, 0
        // Predicated region
        $region45: #{tpu_custom_call.1} parent=31 // pred_check
          %p246 = pneg %p245
        $region46: #{tpu_custom_call.1} parent=31 // pred_check_branch
          %248 = sbr.rel (%p246) target = $region48
        $region47: #{tpu_custom_call.1} parent=31 // pred_region
          %249 = vst [vmem:[#allocation2] sm:$0xff] 0.0
          %250 = vst [vmem:[#allocation2 + $0x8] sm:$0xff] 0.0
          %251 = vst [vmem:[#allocation2 + $0x10] sm:$0xff] 0.0
          %252 = vst [vmem:[#allocation2 + $0x18] sm:$0xff] 0.0
        $region48: #{tpu_custom_call.1} parent=31 // pred_fallthru
          _
        %v253 = vld [vmem:[#allocation2] sm:$0xff]
        %v254 = vld [vmem:[#allocation2 + $0x8] sm:$0xff]
        %v255 = vld [vmem:[#allocation2 + $0x10] sm:$0xff]
        %v256 = vld [vmem:[#allocation2 + $0x18] sm:$0xff]
        %v257 = vld [vmem:[%s210] sm:$0xf]
        %v258 = vld [vmem:[%s210 + $0x4] sm:$0xf]
        %v259 = vld [vmem:[%s210 + $0x8] sm:$0xf]
        %v260 = vld [vmem:[%s210 + $0xc] sm:$0xf]
        %v261 = vld [vmem:[#allocation6] sm:$0xf]
        %v262 = vld [vmem:[#allocation6 + $0x4] sm:$0xf]
        %v263 = vld [vmem:[#allocation6 + $0x8] sm:$0xf]
        %v264 = vld [vmem:[#allocation6 + $0xc] sm:$0xf]
        %v265 = vld [vmem:[#allocation6 + $0x10] sm:$0xf]
        %v266 = vld [vmem:[#allocation6 + $0x14] sm:$0xf]
        %v267 = vld [vmem:[#allocation6 + $0x18] sm:$0xf]
        %v268 = vld [vmem:[#allocation6 + $0x1c] sm:$0xf]
        %v269 = vld [vmem:[#allocation6 + $0x20] sm:$0xf]
        %v270 = vld [vmem:[#allocation6 + $0x24] sm:$0xf]
        %v271 = vld [vmem:[#allocation6 + $0x28] sm:$0xf]
        %v272 = vld [vmem:[#allocation6 + $0x2c] sm:$0xf]
        %v273 = vld [vmem:[#allocation6 + $0x30] sm:$0xf]
        %v274 = vld [vmem:[#allocation6 + $0x34] sm:$0xf]
        %v275 = vld [vmem:[#allocation6 + $0x38] sm:$0xf]
        %v276 = vld [vmem:[#allocation6 + $0x3c] sm:$0xf]
        %v281 = vunpack.c.l.b16 %v257
        %v282 = vunpack.c.l.b16 %v258
        %v283 = vunpack.c.l.b16 %v259
        %v284 = vunpack.c.l.b16 %v260
        %v285 = vpack.c.b16 %v282, %v281
        %v286 = vpack.c.b16 %v284, %v283
        %v305 = vunpack.c.l.b16 %v261
        %v306 = vunpack.c.l.b16 %v262
        %v307 = vunpack.c.l.b16 %v263
        %v308 = vunpack.c.l.b16 %v264
        %v309 = vunpack.c.l.b16 %v265
        %v310 = vunpack.c.l.b16 %v266
        %v311 = vunpack.c.l.b16 %v267
        %v312 = vunpack.c.l.b16 %v268
        %v313 = vunpack.c.l.b16 %v269
        %v314 = vunpack.c.l.b16 %v270
        %v315 = vunpack.c.l.b16 %v271
        %v316 = vunpack.c.l.b16 %v272
        %v317 = vunpack.c.l.b16 %v273
        %v318 = vunpack.c.l.b16 %v274
        %v319 = vunpack.c.l.b16 %v275
        %v320 = vunpack.c.l.b16 %v276
        %v321 = vpack.c.b16 %v306, %v305
        %v322 = vpack.c.b16 %v308, %v307
        %v323 = vpack.c.b16 %v310, %v309
        %v324 = vpack.c.b16 %v312, %v311
        %v325 = vpack.c.b16 %v314, %v313
        %v326 = vpack.c.b16 %v316, %v315
        %v327 = vpack.c.b16 %v318, %v317
        %v328 = vpack.c.b16 %v320, %v319
        %337 = vmatprep.subr.bf16.mxu0 0
        %338 = vmatpush1.bf16.msra.mxu0 %v321
        %339 = vmatprep.subr.bf16.mxu0 0
        %340 = vmatpush1.bf16.msra.mxu0 %v322
        %341 = vmatprep.subr.bf16.mxu0 0
        %342 = vmatpush1.bf16.msra.mxu0 %v323
        %343 = vmatprep.subr.bf16.mxu0 0
        %344 = vmatpush1.bf16.msra.mxu0 %v324
        %345 = vmatprep.subr.bf16.mxu0 0
        %346 = vmatpush1.bf16.msra.mxu0 %v325
        %347 = vmatprep.subr.bf16.mxu0 0
        %348 = vmatpush1.bf16.msra.mxu0 %v326
        %349 = vmatprep.subr.bf16.mxu0 0
        %350 = vmatpush1.bf16.msra.mxu0 %v327
        %351 = vmatprep.subr.bf16.mxu0 0
        %352 = vmatpush1.bf16.msra.mxu0 %v328
        %353 = vmatprep.subr.bf16.mxu0 0
        %354 = vmatpush1.bf16.msra.mxu0 0
        %355 = vmatprep.subr.bf16.mxu0 0
        %356 = vmatpush1.bf16.msra.mxu0 0
        %357 = vmatprep.subr.bf16.mxu0 0
        %358 = vmatpush1.bf16.msra.mxu0 0
        %359 = vmatprep.subr.bf16.mxu0 0
        %360 = vmatpush1.bf16.msra.mxu0 0
        %361 = vmatprep.subr.bf16.mxu0 0
        %362 = vmatpush1.bf16.msra.mxu0 0
        %363 = vmatprep.subr.bf16.mxu0 0
        %364 = vmatpush1.bf16.msra.mxu0 0
        %365 = vmatprep.subr.bf16.mxu0 0
        %366 = vmatpush1.bf16.msra.mxu0 0
        %367 = vmatprep.subr.bf16.mxu0 0
        %368 = vmatpush1.bf16.msra.mxu0 0
        %369 = vmatprep.mubr.bf16.mxu0 0
        %370 = vmatmul.mubr.bf16.gmra.mrb[0].mxu0 %v285
        %v371 = vpop.f32.mrb[0].mxu0
        %v372 = vadd.f32 0.0, %v371
        %v373 = vpop.f32.mrb[0].mxu0
        %v374 = vpop.f32.mrb[0].mxu0
        %v375 = vadd.f32 0.0, %v374
        %v376 = vpop.f32.mrb[0].mxu0
        %377 = vmatprep.mubr.bf16.mxu0 0
        %378 = vmatmul.mubr.bf16.gmra.mrb[0].mxu0 %v286
        %v379 = vpop.f32.mrb[0].mxu0
        %v380 = vadd.f32 0.0, %v379
        %v381 = vpop.f32.mrb[0].mxu0
        %v382 = vpop.f32.mrb[0].mxu0
        %v383 = vadd.f32 0.0, %v382
        %v384 = vpop.f32.mrb[0].mxu0
        %385 = vdwg.mxu0
        %v386 = vadd.f32 %v253, %v372
        %v387 = vadd.f32 %v254, %v375
        %v388 = vadd.f32 %v255, %v380
        %v389 = vadd.f32 %v256, %v383
        %390 = vst [vmem:[#allocation2] sm:$0xff] %v386
        %391 = vst [vmem:[#allocation2 + $0x8] sm:$0xff] %v387
        %392 = vst [vmem:[#allocation2 + $0x10] sm:$0xff] %v388
        %393 = vst [vmem:[#allocation2 + $0x18] sm:$0xff] %v389
        // Predicated region
        $region49: #{tpu_custom_call.1} parent=31 // pred_check
          %p394 = pneg %p245
        $region50: #{tpu_custom_call.1} parent=31 // pred_check_branch
          %396 = sbr.rel (%p394) target = $region52
        $region51: #{tpu_custom_call.1} parent=31 // pred_region
          %v397 = vld [vmem:[#allocation2] sm:$0xff]
          %v398 = vld [vmem:[#allocation2 + $0x8] sm:$0xff]
          %v399 = vld [vmem:[#allocation2 + $0x10] sm:$0xff]
          %v400 = vld [vmem:[#allocation2 + $0x18] sm:$0xff]
          %v401 = vpack.c.bf16 %v398, %v397
          %v402 = vpack.c.bf16 %v400, %v399
          %v403 = vld [vmem:[#allocation8] sm:$0xf]
          %v404 = vld [vmem:[#allocation8 + $0x4] sm:$0xf]
          %v405 = vld [vmem:[#allocation8 + $0x8] sm:$0xf]
          %v406 = vld [vmem:[#allocation8 + $0xc] sm:$0xf]
          %v407 = vld [vmem:[#allocation8 + $0x10] sm:$0xf]
          %v408 = vld [vmem:[#allocation8 + $0x14] sm:$0xf]
          %v409 = vld [vmem:[#allocation8 + $0x18] sm:$0xf]
          %v410 = vld [vmem:[#allocation8 + $0x1c] sm:$0xf]
          %v411 = vld [vmem:[#allocation8 + $0x20] sm:$0xf]
          %v412 = vld [vmem:[#allocation8 + $0x24] sm:$0xf]
          %v413 = vld [vmem:[#allocation8 + $0x28] sm:$0xf]
          %v414 = vld [vmem:[#allocation8 + $0x2c] sm:$0xf]
          %v415 = vld [vmem:[#allocation8 + $0x30] sm:$0xf]
          %v416 = vld [vmem:[#allocation8 + $0x34] sm:$0xf]
          %v417 = vld [vmem:[#allocation8 + $0x38] sm:$0xf]
          %v418 = vld [vmem:[#allocation8 + $0x3c] sm:$0xf]
          %v435 = vunpack.c.l.b16 %v403
          %v436 = vunpack.c.l.b16 %v404
          %v437 = vunpack.c.l.b16 %v405
          %v438 = vunpack.c.l.b16 %v406
          %v439 = vunpack.c.l.b16 %v407
          %v440 = vunpack.c.l.b16 %v408
          %v441 = vunpack.c.l.b16 %v409
          %v442 = vunpack.c.l.b16 %v410
          %v443 = vunpack.c.l.b16 %v411
          %v444 = vunpack.c.l.b16 %v412
          %v445 = vunpack.c.l.b16 %v413
          %v446 = vunpack.c.l.b16 %v414
          %v447 = vunpack.c.l.b16 %v415
          %v448 = vunpack.c.l.b16 %v416
          %v449 = vunpack.c.l.b16 %v417
          %v450 = vunpack.c.l.b16 %v418
          %v451 = vpack.c.b16 %v436, %v435
          %v452 = vpack.c.b16 %v438, %v437
          %v453 = vpack.c.b16 %v440, %v439
          %v454 = vpack.c.b16 %v442, %v441
          %v455 = vpack.c.b16 %v444, %v443
          %v456 = vpack.c.b16 %v446, %v445
          %v457 = vpack.c.b16 %v448, %v447
          %v458 = vpack.c.b16 %v450, %v449
          %467 = vmatprep.subr.bf16.mxu0 0
          %468 = vmatpush1.bf16.msra.mxu0 %v451
          %469 = vmatprep.subr.bf16.mxu0 0
          %470 = vmatpush1.bf16.msra.mxu0 %v452
          %471 = vmatprep.subr.bf16.mxu0 0
          %472 = vmatpush1.bf16.msra.mxu0 %v453
          %473 = vmatprep.subr.bf16.mxu0 0
          %474 = vmatpush1.bf16.msra.mxu0 %v454
          %475 = vmatprep.subr.bf16.mxu0 0
          %476 = vmatpush1.bf16.msra.mxu0 %v455
          %477 = vmatprep.subr.bf16.mxu0 0
          %478 = vmatpush1.bf16.msra.mxu0 %v456
          %479 = vmatprep.subr.bf16.mxu0 0
          %480 = vmatpush1.bf16.msra.mxu0 %v457
          %481 = vmatprep.subr.bf16.mxu0 0
          %482 = vmatpush1.bf16.msra.mxu0 %v458
          %483 = vmatprep.subr.bf16.mxu0 0
          %484 = vmatpush1.bf16.msra.mxu0 0
          %485 = vmatprep.subr.bf16.mxu0 0
          %486 = vmatpush1.bf16.msra.mxu0 0
          %487 = vmatprep.subr.bf16.mxu0 0
          %488 = vmatpush1.bf16.msra.mxu0 0
          %489 = vmatprep.subr.bf16.mxu0 0
          %490 = vmatpush1.bf16.msra.mxu0 0
          %491 = vmatprep.subr.bf16.mxu0 0
          %492 = vmatpush1.bf16.msra.mxu0 0
          %493 = vmatprep.subr.bf16.mxu0 0
          %494 = vmatpush1.bf16.msra.mxu0 0
          %495 = vmatprep.subr.bf16.mxu0 0
          %496 = vmatpush1.bf16.msra.mxu0 0
          %497 = vmatprep.subr.bf16.mxu0 0
          %498 = vmatpush1.bf16.msra.mxu0 0
          %499 = vmatprep.mubr.bf16.mxu0 0
          %500 = vmatmul.mubr.bf16.gmra.mrb[0].mxu0 %v401
          %v501 = vpop.f32.mrb[0].mxu0
          %v502 = vadd.f32 0.0, %v501
          %v503 = vpop.f32.mrb[0].mxu0
          %v504 = vpop.f32.mrb[0].mxu0
          %v505 = vadd.f32 0.0, %v504
          %v506 = vpop.f32.mrb[0].mxu0
          %507 = vmatprep.mubr.bf16.mxu0 0
          %508 = vmatmul.mubr.bf16.gmra.mrb[0].mxu0 %v402
          %v509 = vpop.f32.mrb[0].mxu0
          %v510 = vadd.f32 0.0, %v509
          %v511 = vpop.f32.mrb[0].mxu0
          %v512 = vpop.f32.mrb[0].mxu0
          %v513 = vadd.f32 0.0, %v512
          %v514 = vpop.f32.mrb[0].mxu0
          %515 = vdwg.mxu0
          %516 = vst [vmem:[%s240] sm:$0xff] %v502
          %517 = vst [vmem:[%s240 + $0x8] sm:$0xff] %v505
          %518 = vst [vmem:[%s240 + $0x10] sm:$0xff] %v510
          %519 = vst [vmem:[%s240 + $0x18] sm:$0xff] %v513
        $region52: #{tpu_custom_call.1} parent=31 // pred_fallthru
          _
        %s520 = sand.u32 %s116, 1
        %s521 = scalar_lea.sflag [#allocation5], %s520
        %s522 = sand.u32 %s116, 1
        %s523 = smul.addr %s522, 32
        %s524 = scalar_lea.vmem [#allocation9], %s523
        // Predicated region
        $region53: #{tpu_custom_call.1} parent=31 // pred_check
          %p525 = pneg %p126
        $region54: #{tpu_custom_call.1} parent=31 // pred_check_branch
          %527 = sbr.rel (%p525) target = $region56
        $region55: #{tpu_custom_call.1} parent=31 // pred_region
          %s528 = smul.u32 4, %s25
          %s530 = ssub.s32 512, 512
          %531 = vsyncadd %s521, %s530
          %s532 = smul.addr %s528, 128
          %s533 = scalar_lea.hbm %s3, %s532
          %s534 = sshll.u32 %s524, 4
          %s535 = int_to_ptr.vmem [resolvable:$true] %s534
          %540 = dma.vmem_to_hbm [thread:$0]  %s535, 512, %s533, %s521, 128, 128, 8
        $region56: #{tpu_custom_call.1} parent=31 // pred_fallthru
          _
      $region32: #{tpu_custom_call.1} parent=5 // pred_fallthru
        _
      %p541 = scmp.le.s32.totalorder 2, %s16
      // Predicated region
      $region57: #{tpu_custom_call.1} parent=5 // pred_check
        %p542 = pneg %p541
      $region58: #{tpu_custom_call.1} parent=5 // pred_check_branch
        %544 = sbr.rel (%p542) target = $region60
      $region59: #{tpu_custom_call.1} parent=5 // pred_region
        %s545 = ssub.s32 %s16, 2
        // Predicated region
        $region61: #{tpu_custom_call.1} parent=59 // pred_check
          %p546 = pneg %p132
        $region62: #{tpu_custom_call.1} parent=59 // pred_check_branch
          %548 = sbr.rel (%p546) target = $region64
        $region63: #{tpu_custom_call.1} parent=59 // pred_region
          %s549 = sand.u32 %s117, 1
          %s550 = scalar_lea.sflag [#allocation5], %s549
          %s551 = sand.u32 %s117, 1
          %s552 = smul.addr %s551, 32
          %s553 = scalar_lea.vmem [#allocation9], %s552
          %554 = dma.done %s550, 512
        $region64: #{tpu_custom_call.1} parent=59 // pred_fallthru
          _
      $region60: #{tpu_custom_call.1} parent=5 // pred_fallthru
        _
    $region6: #{tpu_custom_call.1} parent=1 // loop_footer
      %s20 = sadd.s32 1, %s16
    $region7: #{tpu_custom_call.1} parent=1 // loop_footer_branch
      %15 = sbr.rel target = $region3
    $region8: #{tpu_custom_call.1} parent=1 // loop_exit
      _
    %555 = vsyncpa [#allocation4], 1
    %s556 = scalar_lea.sflag [#allocation4], 1
    %557 = vsyncpa %s556, 1
    %558 = vsyncpa [#allocation7], 1
    %559 = vsyncpa [#allocation5], 1
    %s560 = scalar_lea.sflag [#allocation5], 1
    %561 = vsyncpa %s560, 1

</llo_original>
